<compile_context>
chip_gen: v5e
topology: v5e:2x2
jax: 0.10.0
libtpu: 0.0.40
codegen_flags: <defaults>
</compile_context>

<pallas_src>
import functools

import jax
import jax.numpy as jnp
from jax.experimental import pallas as pl
from jax.experimental.pallas import tpu as pltpu

LEAKY_SLOPE = 0.01                 # F.leaky_relu default negative slope
VMEM_LIMIT = 48 * 1024 * 1024      # explicit cap: safe on v5e/v6e/v7x


# ---------------------------------------------------------------------------
# Tiling helpers
# ---------------------------------------------------------------------------
def _pick_sublane_tile(n, pref):
    """Largest tile (multiple of 8) dividing n; fall back to the whole axis."""
    for t in (pref, 512, 256, 128, 64, 32, 16, 8):
        if t <= n and n % t == 0:
            return t
    return n


def _pick_lane_tile(n, pref):
    """Largest tile (multiple of 128) dividing n; fall back to the whole axis."""
    for t in (pref, 512, 256, 128):
        if t <= n and n % t == 0:
            return t
    return n


# ---------------------------------------------------------------------------
# Kernel 1: wide feature transform  xw_all = x @ [W_in|W_out|W_un|W_res]
# ---------------------------------------------------------------------------
def _xw_kernel(x_ref, w_ref, out_ref):
    out_ref[...] = jnp.dot(
        x_ref[...], w_ref[...], preferred_element_type=jnp.float32
    ).astype(out_ref.dtype)


def xw_call(x_bf16, w_all_bf16, tile_n=256):
    n, d_in = x_bf16.shape
    s = w_all_bf16.shape[1]
    tn = _pick_sublane_tile(n, tile_n)
    return pl.pallas_call(
        _xw_kernel,
        out_shape=jax.ShapeDtypeStruct((n, s), jnp.bfloat16),
        grid=(n // tn,),
        in_specs=[pl.BlockSpec((tn, d_in), lambda i: (i, 0)),
                  pl.BlockSpec((d_in, s), lambda i: (0, 0))],
        out_specs=pl.BlockSpec((tn, s), lambda i: (i, 0)),
        compiler_params=pltpu.CompilerParams(
            dimension_semantics=("parallel",),
            vmem_limit_bytes=VMEM_LIMIT),
    )(x_bf16, w_all_bf16)


# ---------------------------------------------------------------------------
# Kernel 2: gated propagation + residual + leaky_relu (+ fused decoder)
# ---------------------------------------------------------------------------
def _prop_kernel(fuse_decoder, d_out, eps, *refs):
    if fuse_decoder:
        (ain_ref, aout_ref, aun_ref, xw_src_ref, xw_dst_ref,
         gates_ref, affine_ref, w1_ref, b1_ref, w2_ref, b2_ref,
         logp_ref, emb_ref, acc_in, acc_out, acc_un) = refs
    else:
        (ain_ref, aout_ref, aun_ref, xw_src_ref, xw_dst_ref,
         gates_ref, affine_ref, h_ref, acc_in, acc_out, acc_un) = refs

    f32 = jnp.float32
    k = pl.program_id(1)

    @pl.when(k == 0)
    def _():
        acc_in[...] = jnp.zeros_like(acc_in)
        acc_out[...] = jnp.zeros_like(acc_out)
        acc_un[...] = jnp.zeros_like(acc_un)

    # bf16 MXU matmuls, f32 accumulation.  xw slots: [in_tot|out_tot|un_tot|res]
    xw = xw_src_ref[...]                                  # (TILE_K, 4*d_out)
    acc_in[...] += jnp.dot(ain_ref[...], xw[:, 0:d_out],
                           preferred_element_type=f32)
    acc_out[...] += jnp.dot(aout_ref[...], xw[:, d_out:2 * d_out],
                            preferred_element_type=f32)
    acc_un[...] += jnp.dot(aun_ref[...], xw[:, 2 * d_out:3 * d_out],
                           preferred_element_type=f32)

    @pl.when(k == pl.num_programs(1) - 1)
    def _():
        g = gates_ref[...]                                # (TILE_I, 3) f32
        res = xw_dst_ref[:, 3 * d_out:4 * d_out].astype(f32)
        h = (g[:, 0:1] * acc_in[...] + g[:, 1:2] * acc_out[...]
             + g[:, 2:3] * acc_un[...] + affine_ref[...] + res)
        h = jnp.where(h >= 0.0, h, LEAKY_SLOPE * h)       # leaky_relu
        if fuse_decoder:
            # decoder_fc: Linear -> ReLU -> (Dropout = eval identity) -> Linear
            z = jnp.dot(h, w1_ref[...], preferred_element_type=f32) + b1_ref[...]
            z = jnp.maximum(z, 0.0)
            logits = jnp.dot(z, w2_ref[...], preferred_element_type=f32) + b2_ref[...]
            m = jnp.max(logits, axis=-1, keepdims=True)
            lse = jnp.log(jnp.sum(jnp.exp(logits - m), axis=-1, keepdims=True)) + m
            logp_ref[...] = logits - lse                  # log_softmax
            nrm = jnp.sqrt(jnp.sum(h * h, axis=-1, keepdims=True))
            emb_ref[...] = h / jnp.maximum(nrm, eps)      # L2-normalize
        else:
            h_ref[...] = h


def gcn_prop_call(a_in, a_out, a_un, xw_all, gates, affine, d_out,
                  decoder=None, l2_eps=1e-12, tile_i=256, tile_k=512):
    n = a_in.shape[0]
    ti = _pick_sublane_tile(n, tile_i)
    tk = _pick_lane_tile(n, tile_k)
    s = xw_all.shape[1]
    grid = (n // ti, n // tk)

    adj_spec = pl.BlockSpec((ti, tk), lambda i, k: (i, k))
    in_specs = [
        adj_spec, adj_spec, adj_spec,                       # A_in, A_out, A_un
        pl.BlockSpec((tk, s), lambda i, k: (k, 0)),          # xw source block
        pl.BlockSpec((ti, s), lambda i, k: (i, 0)),          # xw dest block (res)
        pl.BlockSpec((ti, gates.shape[1]), lambda i, k: (i, 0)),
        pl.BlockSpec((ti, d_out), lambda i, k: (i, 0)),      # affine (bias+const)
    ]
    args = [a_in, a_out, a_un, xw_all, xw_all, gates, affine]

    fuse_decoder = decoder is not None
    if fuse_decoder:
        w1, b1, w2, b2 = decoder
        c = w2.shape[1]
        in_specs += [pl.BlockSpec(w1.shape, lambda i, k: (0, 0)),
                     pl.BlockSpec(b1.shape, lambda i, k: (0, 0)),
                     pl.BlockSpec(w2.shape, lambda i, k: (0, 0)),
                     pl.BlockSpec(b2.shape, lambda i, k: (0, 0))]
        args += [w1, b1, w2, b2]
        out_shape = (jax.ShapeDtypeStruct((n, c), jnp.float32),
                     jax.ShapeDtypeStruct((n, d_out), jnp.float32))
        out_specs = (pl.BlockSpec((ti, c), lambda i, k: (i, 0)),
                     pl.BlockSpec((ti, d_out), lambda i, k: (i, 0)))
    else:
        out_shape = jax.ShapeDtypeStruct((n, d_out), jnp.float32)
        out_specs = pl.BlockSpec((ti, d_out), lambda i, k: (i, 0))

    kernel = functools.partial(_prop_kernel, fuse_decoder, d_out, l2_eps)
    return pl.pallas_call(
        kernel,
        out_shape=out_shape,
        grid=grid,
        in_specs=in_specs,
        out_specs=out_specs,
        scratch_shapes=[pltpu.VMEM((ti, d_out), jnp.float32)] * 3,
        compiler_params=pltpu.CompilerParams(
            dimension_semantics=("parallel", "arbitrary"),
            vmem_limit_bytes=VMEM_LIMIT),
    )(*args)


# ---------------------------------------------------------------------------
# Parameter construction (PyTorch init) + exact algebraic folding
# ---------------------------------------------------------------------------
def _xavier(key, shape):
    fan_out, fan_in = shape
    a = jnp.sqrt(6.0 / (fan_in + fan_out))
    return jax.random.uniform(key, shape, jnp.float32, minval=-a, maxval=a)


def make_params(key, layer_dims, num_nodes, n_gram_len, one_gram_dim,
                max_pe_len, num_classes):
    params = {"layers": [], "n_gram_len": n_gram_len, "one_gram_dim": one_gram_dim}

    key, k_pe = jax.random.split(key)
    params["pe"] = jax.random.normal(k_pe, (max_pe_len, one_gram_dim), jnp.float32)

    for i in range(len(layer_dims) - 1):
        d_in, d_out = layer_dims[i], layer_dims[i + 1]
        keys = jax.random.split(key, 8)
        key = keys[0]

        # nn.Linear weights are (out, in); transpose -> (in, out) for x @ W.
        w_main_in = _xavier(keys[1], (d_out, d_in)).T
        w_main_out = _xavier(keys[2], (d_out, d_in)).T
        w_undir = _xavier(keys[3], (d_out, d_in)).T
        w_shared = _xavier(keys[4], (d_out, d_in)).T
        constant = _xavier(keys[5], (num_nodes, d_out))

        # biases all zero at init (reset_parameters)
        b_main_in = jnp.zeros((d_out,), jnp.float32)
        b_main_out = jnp.zeros((d_out,), jnp.float32)
        b_undir = jnp.zeros((d_out,), jnp.float32)
        b_dsh_in = jnp.zeros((d_out,), jnp.float32)
        b_dsh_out = jnp.zeros((d_out,), jnp.float32)
        b_ush = jnp.zeros((d_out,), jnp.float32)

        # vector coefficients all ones at init
        c_in = jnp.ones((num_nodes, 1), jnp.float32)
        c_out = jnp.ones((num_nodes, 1), jnp.float32)
        c_dir = jnp.ones((num_nodes, 1), jnp.float32)
        c_und = jnp.ones((num_nodes, 1), jnp.float32)
        c_all = jnp.ones((num_nodes, 1), jnp.float32)

        if d_in != d_out:
            w_res = _xavier(keys[6], (d_out, d_in)).T          # projection
            b_res = jnp.zeros((d_out,), jnp.float32)
        else:
            w_res = jnp.eye(d_in, dtype=jnp.float32)           # nn.Identity
            b_res = jnp.zeros((d_out,), jnp.float32)

        # --- exact folding (see module-level comment) ---
        g_in = c_all * c_dir * c_in
        g_out = c_all * c_dir * c_out
        g_un = c_all * c_und
        gates = jnp.concatenate([g_in, g_out, g_un], axis=1)        # (N, 3) f32
        affine = (g_in * (b_main_in + b_dsh_in)
                  + g_out * (b_main_out + b_dsh_out)
                  + g_un * (b_undir + b_ush)
                  + constant + b_res)                                # (N, D) f32
        w_all = jnp.concatenate(
            [w_main_in + w_shared, w_main_out + w_shared,
             w_undir + w_shared, w_res], axis=1).astype(jnp.bfloat16)  # (Din, 4D)

        params["layers"].append(
            {"w_all": w_all, "gates": gates, "affine": affine, "d_out": d_out})

    d_final = layer_dims[-1]
    d_hidden = d_final // 2 if d_final > 1 else 1
    keys = jax.random.split(key, 3)
    params["dec_w1"] = _xavier(keys[0], (d_hidden, d_final)).T
    params["dec_b1"] = jnp.zeros((1, d_hidden), jnp.float32)
    params["dec_w2"] = _xavier(keys[1], (num_classes, d_hidden)).T
    params["dec_b2"] = jnp.zeros((1, num_classes), jnp.float32)
    return params


def dense_adjacency(num_nodes, src, dst, weight):
    # A[dst, src] = sum of weights -> A @ x == scatter_add over incoming edges
    # (PyG MessagePassing aggr='add', flow source_to_target).
    a = jnp.zeros((num_nodes, num_nodes), jnp.float32)
    return a.at[dst, src].add(weight)


# ---------------------------------------------------------------------------
# Full-model forward (glue in plain JAX, hot path in Pallas)
# ---------------------------------------------------------------------------
def protgram_forward(params, x, a_in, a_out, a_un, l2_eps=1e-12,
                     tile_i=256, tile_k=512):
    n = x.shape[0]
    n_gram, one_dim = params["n_gram_len"], params["one_gram_dim"]

    # _apply_pe: positional-encoding add (glue, outside the hot path)
    h = x
    if n_gram > 0 and one_dim > 0 and x.shape[1] == n_gram * one_dim:
        pos_to_enc = min(n_gram, params["pe"].shape[0])
        if pos_to_enc > 0:
            xr = x.reshape(n, n_gram, one_dim)
            xr = xr.at[:, :pos_to_enc, :].add(params["pe"][:pos_to_enc][None, :, :])
            h = xr.reshape(n, n_gram * one_dim)

    # bf16 matmul operands (f32 accumulation inside the kernels).
    a_in_b = a_in.astype(jnp.bfloat16)
    a_out_b = a_out.astype(jnp.bfloat16)
    a_un_b = a_un.astype(jnp.bfloat16)
    # TODO(synk): the adjacencies are re-streamed from HBM for every layer; a
    # layer-fused pallas_call keeping them VMEM-resident would remove the
    # dominant HBM term at large N.

    n_layers = len(params["layers"])
    for li, lp in enumerate(params["layers"]):
        xw = xw_call(h.astype(jnp.bfloat16), lp["w_all"])
        if li == n_layers - 1:
            # final layer: decoder + log_softmax + L2-norm fused as epilogue
            return gcn_prop_call(
                a_in_b, a_out_b, a_un_b, xw, lp["gates"], lp["affine"],
                lp["d_out"],
                decoder=(params["dec_w1"], params["dec_b1"],
                         params["dec_w2"], params["dec_b2"]),
                l2_eps=l2_eps, tile_i=tile_i, tile_k=tile_k)
        h = gcn_prop_call(a_in_b, a_out_b, a_un_b, xw, lp["gates"],
                          lp["affine"], lp["d_out"],
                          tile_i=tile_i, tile_k=tile_k)
        # TODO(synk): inter-layer Dropout treated as eval-mode identity.


# ---------------------------------------------------------------------------
# Demo
# ---------------------------------------------------------------------------
if __name__ == "__main__":
    key = jax.random.PRNGKey(0)

    # Small but large enough to exercise the (row-block, source-block) grid.
    NUM_NODES = 256
    N_GRAM_LEN = 2
    ONE_GRAM_DIM = 8
    MAX_PE_LEN = 4
    LAYER_DIMS = [N_GRAM_LEN * ONE_GRAM_DIM, 32, 32]   # [16, 32, 32]
    NUM_CLASSES = 5
    NUM_EDGES = 2048

    k_x, k_src, k_dst, k_w, k_par = jax.random.split(key, 5)

    x = jax.random.normal(k_x, (NUM_NODES, LAYER_DIMS[0]), jnp.float32)

    src = jax.random.randint(k_src, (3, NUM_EDGES), 0, NUM_NODES)
    dst = jax.random.randint(k_dst, (3, NUM_EDGES), 0, NUM_NODES)
    w = jax.random.uniform(k_w, (3, NUM_EDGES), jnp.float32, 0.1, 1.0)

    a_in = dense_adjacency(NUM_NODES, src[0], dst[0], w[0])
    a_out = dense_adjacency(NUM_NODES, src[1], dst[1], w[1])
    # undirected graph input: coalesce by summing both directions
    a_un = dense_adjacency(NUM_NODES, src[2], dst[2], w[2])
    a_un = a_un + a_un.T

    params = make_params(k_par, LAYER_DIMS, NUM_NODES, N_GRAM_LEN,
                         ONE_GRAM_DIM, MAX_PE_LEN, NUM_CLASSES)

    log_probs, norm_emb = protgram_forward(params, x, a_in, a_out, a_un,
                                           tile_i=128, tile_k=128)
    jax.block_until_ready((log_probs, norm_emb))

    assert log_probs.shape == (NUM_NODES, NUM_CLASSES)
    assert norm_emb.shape == (NUM_NODES, LAYER_DIMS[-1])
    assert bool(jnp.all(jnp.isfinite(log_probs)))
    assert bool(jnp.all(jnp.isfinite(norm_emb)))

    print("KERNEL_OK")
</pallas_src>

<mosaic_0001>
module attributes {stable_mosaic.version = 11 : i64} {
  func.func @_xw_kernel(%arg0: i32, %arg1: memref<256x16xbf16, #tpu.memory_space<vmem>>, %arg2: memref<16x128xbf16, #tpu.memory_space<vmem>>, %arg3: memref<256x128xbf16, #tpu.memory_space<vmem>>) attributes {dimension_semantics = [#tpu.dimension_semantics<parallel>], iteration_bounds = array<i64: 1>, scalar_prefetch = 0 : i64, scratch_operands = 0 : i64, tpu.core_type = #tpu.core_type<tc>, window_params = [{transform_indices = @transform_0, window_bounds = array<i64: 256, 16>}, {pipeline_mode = #tpu.pipeline_mode<synchronous>, transform_indices = @transform_1, window_bounds = array<i64: 16, 128>}, {transform_indices = @transform_2, window_bounds = array<i64: 256, 128>}]} {
    %c0 = arith.constant 0 : index
    %c0_0 = arith.constant 0 : index
    %0 = vector.load %arg1[%c0, %c0_0] : memref<256x16xbf16, #tpu.memory_space<vmem>>, vector<256x16xbf16>
    %c0_1 = arith.constant 0 : index
    %c0_2 = arith.constant 0 : index
    %1 = vector.load %arg2[%c0_1, %c0_2] : memref<16x128xbf16, #tpu.memory_space<vmem>>, vector<16x128xbf16>
    %cst = arith.constant dense<0.000000e+00> : vector<256x128xf32>
    %2 = tpu.matmul %0, %1, %cst {dimension_numbers = #tpu.dot_dimension_numbers<[1], [0], [0], [1], [0, 0, 1, 1], [], []>} : vector<256x16xbf16>, vector<16x128xbf16>, vector<256x128xf32> -> vector<256x128xf32>
    %3 = arith.truncf %2 : vector<256x128xf32> to vector<256x128xbf16>
    %c0_3 = arith.constant 0 : index
    %c0_4 = arith.constant 0 : index
    %4 = vector.load %arg3[%c0_3, %c0_4] : memref<256x128xbf16, #tpu.memory_space<vmem>>, vector<256x128xbf16>
    tpu.vector_store %arg3[%c0_3, %c0_4], %3 {strides = array<i32>} : memref<256x128xbf16, #tpu.memory_space<vmem>>, vector<256x128xbf16>,
    return
  }
  func.func @transform_0(%arg0: i32) -> (i32, i32) {
    %c0_i32 = arith.constant 0 : i32
    %c0_i32_0 = arith.constant 0 : i32
    return %arg0, %c0_i32 : i32, i32
  }
  func.func @transform_1(%arg0: i32) -> (i32, i32) {
    %c0_i32 = arith.constant 0 : i32
    %c0_i32_0 = arith.constant 0 : i32
    %c0_i32_1 = arith.constant 0 : i32
    return %c0_i32, %c0_i32_0 : i32, i32
  }
  func.func @transform_2(%arg0: i32) -> (i32, i32) {
    %c0_i32 = arith.constant 0 : i32
    %c0_i32_0 = arith.constant 0 : i32
    return %arg0, %c0_i32 : i32, i32
  }
}

</mosaic_0001>

<llo_original>
// kernel: tpu_custom_call.1
$region0: #{tpu_custom_call.1}
  #allocation0 [shape = 'u32[]', space=smem, size = 0x4, offset = 0x4, fixed_abs, tag = 'smem constant byte address 0x4 - core index']
  #allocation1 [shape = 'u32[72,128]{1,0:T(1,128)}', space=vmem, size = 0x9000, scoped, tag = 'internal scratch']
  %s0 = inlined_call_operand.vmem [shape: bf16[256,16], index: 0, kind: input, shape index: {}]
  %s1 = inlined_call_operand.vmem [shape: bf16[16,128], index: 1, kind: input, shape index: {}]
  %s2 = inlined_call_operand.hbm [shape: bf16[256,128], index: 2, kind: output, shape index: {}]
  %s3 = sld [smem:[#allocation0]]
  $region18: #{tpu_custom_call.1} parent=0
    _
  %s5 = ssub.s32 1, %s3
  %s6 = scalar_select 0, %s5, %s3
  $region1: #{tpu_custom_call.1} parent=0
    #allocation2 [shape = 'u8[65536]{0}', space=vmem, size = 0x10000, scoped, tag = 'output window, operand 0, single buffered']
    #allocation3 [shape = 's32[1]{0}', space=sflag, size = 0x4, scoped, tag = 'scoped memory for tpu_custom_call.1']
    %7 = vsyncpa [#allocation3], 0
    // Predicated region
    $region2: #{tpu_custom_call.1} parent=1 // pred_check
      _
    $region3: #{tpu_custom_call.1} parent=1 // pred_check_branch
      %9 = sbr.rel (0) target = $region5
    $region4: #{tpu_custom_call.1} parent=1 // pred_region
      _
    $region5: #{tpu_custom_call.1} parent=1 // pred_fallthru
      _
    // Predicated region
    $region6: #{tpu_custom_call.1} parent=1 // pred_check
      _
    $region7: #{tpu_custom_call.1} parent=1 // pred_check_branch
      %11 = sbr.rel (0) target = $region9
    $region8: #{tpu_custom_call.1} parent=1 // pred_region
      _
    $region9: #{tpu_custom_call.1} parent=1 // pred_fallthru
      _
    %v13 = vld [vmem:[%s0] sm:$0xf]
    %v14 = vld [vmem:[%s0 + $0x4] sm:$0xf]
    %v15 = vld [vmem:[%s0 + $0x8] sm:$0xf]
    %v16 = vld [vmem:[%s0 + $0xc] sm:$0xf]
    %v17 = vld [vmem:[%s0 + $0x10] sm:$0xf]
    %v18 = vld [vmem:[%s0 + $0x14] sm:$0xf]
    %v19 = vld [vmem:[%s0 + $0x18] sm:$0xf]
    %v20 = vld [vmem:[%s0 + $0x1c] sm:$0xf]
    %v21 = vld [vmem:[%s0 + $0x20] sm:$0xf]
    %v22 = vld [vmem:[%s0 + $0x24] sm:$0xf]
    %v23 = vld [vmem:[%s0 + $0x28] sm:$0xf]
    %v24 = vld [vmem:[%s0 + $0x2c] sm:$0xf]
    %v25 = vld [vmem:[%s0 + $0x30] sm:$0xf]
    %v26 = vld [vmem:[%s0 + $0x34] sm:$0xf]
    %v27 = vld [vmem:[%s0 + $0x38] sm:$0xf]
    %v28 = vld [vmem:[%s0 + $0x3c] sm:$0xf]
    %v29 = vld [vmem:[%s0 + $0x40] sm:$0xf]
    %v30 = vld [vmem:[%s0 + $0x44] sm:$0xf]
    %v31 = vld [vmem:[%s0 + $0x48] sm:$0xf]
    %v32 = vld [vmem:[%s0 + $0x4c] sm:$0xf]
    %v33 = vld [vmem:[%s0 + $0x50] sm:$0xf]
    %v34 = vld [vmem:[%s0 + $0x54] sm:$0xf]
    %v35 = vld [vmem:[%s0 + $0x58] sm:$0xf]
    %v36 = vld [vmem:[%s0 + $0x5c] sm:$0xf]
    %v37 = vld [vmem:[%s0 + $0x60] sm:$0xf]
    %v38 = vld [vmem:[%s0 + $0x64] sm:$0xf]
    %v39 = vld [vmem:[%s0 + $0x68] sm:$0xf]
    %v40 = vld [vmem:[%s0 + $0x6c] sm:$0xf]
    %v41 = vld [vmem:[%s0 + $0x70] sm:$0xf]
    %v42 = vld [vmem:[%s0 + $0x74] sm:$0xf]
    %v43 = vld [vmem:[%s0 + $0x78] sm:$0xf]
    %v44 = vld [vmem:[%s0 + $0x7c] sm:$0xf]
    %v45 = vld [vmem:[%s1] sm:$0xf]
    %v46 = vld [vmem:[%s1 + $0x4] sm:$0xf]
    %v79 = vunpack.c.l.b16 %v13
    %v80 = vunpack.c.l.b16 %v14
    %v81 = vunpack.c.l.b16 %v15
    %v82 = vunpack.c.l.b16 %v16
    %v83 = vunpack.c.l.b16 %v17
    %v84 = vunpack.c.l.b16 %v18
    %v85 = vunpack.c.l.b16 %v19
    %v86 = vunpack.c.l.b16 %v20
    %v87 = vunpack.c.l.b16 %v21
    %v88 = vunpack.c.l.b16 %v22
    %v89 = vunpack.c.l.b16 %v23
    %v90 = vunpack.c.l.b16 %v24
    %v91 = vunpack.c.l.b16 %v25
    %v92 = vunpack.c.l.b16 %v26
    %v93 = vunpack.c.l.b16 %v27
    %v94 = vunpack.c.l.b16 %v28
    %v95 = vunpack.c.l.b16 %v29
    %v96 = vunpack.c.l.b16 %v30
    %v97 = vunpack.c.l.b16 %v31
    %v98 = vunpack.c.l.b16 %v32
    %v99 = vunpack.c.l.b16 %v33
    %v100 = vunpack.c.l.b16 %v34
    %v101 = vunpack.c.l.b16 %v35
    %v102 = vunpack.c.l.b16 %v36
    %v103 = vunpack.c.l.b16 %v37
    %v104 = vunpack.c.l.b16 %v38
    %v105 = vunpack.c.l.b16 %v39
    %v106 = vunpack.c.l.b16 %v40
    %v107 = vunpack.c.l.b16 %v41
    %v108 = vunpack.c.l.b16 %v42
    %v109 = vunpack.c.l.b16 %v43
    %v110 = vunpack.c.l.b16 %v44
    %v111 = vpack.c.b16 %v80, %v79
    %v112 = vpack.c.b16 %v82, %v81
    %v113 = vpack.c.b16 %v84, %v83
    %v114 = vpack.c.b16 %v86, %v85
    %v115 = vpack.c.b16 %v88, %v87
    %v116 = vpack.c.b16 %v90, %v89
    %v117 = vpack.c.b16 %v92, %v91
    %v118 = vpack.c.b16 %v94, %v93
    %v119 = vpack.c.b16 %v96, %v95
    %v120 = vpack.c.b16 %v98, %v97
    %v121 = vpack.c.b16 %v100, %v99
    %v122 = vpack.c.b16 %v102, %v101
    %v123 = vpack.c.b16 %v104, %v103
    %v124 = vpack.c.b16 %v106, %v105
    %v125 = vpack.c.b16 %v108, %v107
    %v126 = vpack.c.b16 %v110, %v109
    %v129 = vunpack.c.l.b16 %v45
    %v130 = vunpack.c.l.b16 %v46
    %v131 = vpack.c.b16 %v130, %v129
    %vm133 = vcmask 130048
    %v135 = vsel %vm133, %v111, 0
    %v138 = vsel %vm133, %v112, 0
    %v141 = vsel %vm133, %v113, 0
    %v144 = vsel %vm133, %v114, 0
    %v147 = vsel %vm133, %v115, 0
    %v150 = vsel %vm133, %v116, 0
    %v153 = vsel %vm133, %v117, 0
    %v156 = vsel %vm133, %v118, 0
    %v159 = vsel %vm133, %v119, 0
    %v162 = vsel %vm133, %v120, 0
    %v165 = vsel %vm133, %v121, 0
    %v168 = vsel %vm133, %v122, 0
    %v171 = vsel %vm133, %v123, 0
    %v174 = vsel %vm133, %v124, 0
    %v177 = vsel %vm133, %v125, 0
    %v180 = vsel %vm133, %v126, 0
    %182 = vmatpush.bf16.msra.mxu0 0
    %183 = vmatpush.bf16.msra.mxu0 0
    %184 = vmatpush.bf16.msra.mxu0 0
    %185 = vmatpush.bf16.msra.mxu0 0
    %186 = vmatpush.bf16.msra.mxu0 0
    %187 = vmatpush.bf16.msra.mxu0 0
    %188 = vmatpush.bf16.msra.mxu0 0
    %189 = vmatpush.bf16.msra.mxu0 %v131
    %190 = vmatmul.bf16.gmra.mxu0 %v135
    %v191 = vpop.f32.mrf.mxu0
    %v192 = vadd.f32 0.0, %v191
    %v193 = vpop.f32.mrf.mxu0
    %v194 = vadd.f32 0.0, %v193
    %195 = vmatmul.bf16.gmra.mxu0 %v138
    %v196 = vpop.f32.mrf.mxu0
    %v197 = vadd.f32 0.0, %v196
    %v198 = vpop.f32.mrf.mxu0
    %v199 = vadd.f32 0.0, %v198
    %200 = vmatmul.bf16.gmra.mxu0 %v141
    %v201 = vpop.f32.mrf.mxu0
    %v202 = vadd.f32 0.0, %v201
    %v203 = vpop.f32.mrf.mxu0
    %v204 = vadd.f32 0.0, %v203
    %205 = vmatmul.bf16.gmra.mxu0 %v144
    %v206 = vpop.f32.mrf.mxu0
    %v207 = vadd.f32 0.0, %v206
    %v208 = vpop.f32.mrf.mxu0
    %v209 = vadd.f32 0.0, %v208
    %210 = vmatmul.bf16.gmra.mxu0 %v147
    %v211 = vpop.f32.mrf.mxu0
    %v212 = vadd.f32 0.0, %v211
    %v213 = vpop.f32.mrf.mxu0
    %v214 = vadd.f32 0.0, %v213
    %215 = vmatmul.bf16.gmra.mxu0 %v150
    %v216 = vpop.f32.mrf.mxu0
    %v217 = vadd.f32 0.0, %v216
    %v218 = vpop.f32.mrf.mxu0
    %v219 = vadd.f32 0.0, %v218
    %220 = vmatmul.bf16.gmra.mxu0 %v153
    %v221 = vpop.f32.mrf.mxu0
    %v222 = vadd.f32 0.0, %v221
    %v223 = vpop.f32.mrf.mxu0
    %v224 = vadd.f32 0.0, %v223
    %225 = vmatmul.bf16.gmra.mxu0 %v156
    %v226 = vpop.f32.mrf.mxu0
    %v227 = vadd.f32 0.0, %v226
    %v228 = vpop.f32.mrf.mxu0
    %v229 = vadd.f32 0.0, %v228
    %230 = vmatmul.bf16.gmra.mxu0 %v159
    %v231 = vpop.f32.mrf.mxu0
    %v232 = vadd.f32 0.0, %v231
    %v233 = vpop.f32.mrf.mxu0
    %v234 = vadd.f32 0.0, %v233
    %235 = vmatmul.bf16.gmra.mxu0 %v162
    %v236 = vpop.f32.mrf.mxu0
    %v237 = vadd.f32 0.0, %v236
    %v238 = vpop.f32.mrf.mxu0
    %v239 = vadd.f32 0.0, %v238
    %240 = vmatmul.bf16.gmra.mxu0 %v165
    %v241 = vpop.f32.mrf.mxu0
    %v242 = vadd.f32 0.0, %v241
    %v243 = vpop.f32.mrf.mxu0
    %v244 = vadd.f32 0.0, %v243
    %245 = vmatmul.bf16.gmra.mxu0 %v168
    %v246 = vpop.f32.mrf.mxu0
    %v247 = vadd.f32 0.0, %v246
    %v248 = vpop.f32.mrf.mxu0
    %v249 = vadd.f32 0.0, %v248
    %250 = vmatmul.bf16.gmra.mxu0 %v171
    %v251 = vpop.f32.mrf.mxu0
    %v252 = vadd.f32 0.0, %v251
    %v253 = vpop.f32.mrf.mxu0
    %v254 = vadd.f32 0.0, %v253
    %255 = vmatmul.bf16.gmra.mxu0 %v174
    %v256 = vpop.f32.mrf.mxu0
    %v257 = vadd.f32 0.0, %v256
    %v258 = vpop.f32.mrf.mxu0
    %v259 = vadd.f32 0.0, %v258
    %260 = vmatmul.bf16.gmra.mxu0 %v177
    %v261 = vpop.f32.mrf.mxu0
    %v262 = vadd.f32 0.0, %v261
    %v263 = vpop.f32.mrf.mxu0
    %v264 = vadd.f32 0.0, %v263
    %265 = vmatmul.bf16.gmra.mxu0 %v180
    %v266 = vpop.f32.mrf.mxu0
    %v267 = vadd.f32 0.0, %v266
    %v268 = vpop.f32.mrf.mxu0
    %v269 = vadd.f32 0.0, %v268
    %270 = vdwg.mxu0
    %v271 = vpack.c.bf16 %v192, %v192
    %v272 = vpack.c.bf16 %v194, %v194
    %v273 = vpack.c.bf16 %v197, %v197
    %v274 = vpack.c.bf16 %v199, %v199
    %v275 = vpack.c.bf16 %v202, %v202
    %v276 = vpack.c.bf16 %v204, %v204
    %v277 = vpack.c.bf16 %v207, %v207
    %v278 = vpack.c.bf16 %v209, %v209
    %v279 = vpack.c.bf16 %v212, %v212
    %v280 = vpack.c.bf16 %v214, %v214
    %v281 = vpack.c.bf16 %v217, %v217
    %v282 = vpack.c.bf16 %v219, %v219
    %v283 = vpack.c.bf16 %v222, %v222
    %v284 = vpack.c.bf16 %v224, %v224
    %v285 = vpack.c.bf16 %v227, %v227
    %v286 = vpack.c.bf16 %v229, %v229
    %v287 = vpack.c.bf16 %v232, %v232
    %v288 = vpack.c.bf16 %v234, %v234
    %v289 = vpack.c.bf16 %v237, %v237
    %v290 = vpack.c.bf16 %v239, %v239
    %v291 = vpack.c.bf16 %v242, %v242
    %v292 = vpack.c.bf16 %v244, %v244
    %v293 = vpack.c.bf16 %v247, %v247
    %v294 = vpack.c.bf16 %v249, %v249
    %v295 = vpack.c.bf16 %v252, %v252
    %v296 = vpack.c.bf16 %v254, %v254
    %v297 = vpack.c.bf16 %v257, %v257
    %v298 = vpack.c.bf16 %v259, %v259
    %v299 = vpack.c.bf16 %v262, %v262
    %v300 = vpack.c.bf16 %v264, %v264
    %v301 = vpack.c.bf16 %v267, %v267
    %v302 = vpack.c.bf16 %v269, %v269
    %303 = vst [vmem:[#allocation2] sm:$0xf] %v271
    %304 = vst [vmem:[#allocation2 + $0x4] sm:$0xf] %v272
    %305 = vst [vmem:[#allocation2 + $0x8] sm:$0xf] %v273
    %306 = vst [vmem:[#allocation2 + $0xc] sm:$0xf] %v274
    %307 = vst [vmem:[#allocation2 + $0x10] sm:$0xf] %v275
    %308 = vst [vmem:[#allocation2 + $0x14] sm:$0xf] %v276
    %309 = vst [vmem:[#allocation2 + $0x18] sm:$0xf] %v277
    %310 = vst [vmem:[#allocation2 + $0x1c] sm:$0xf] %v278
    %311 = vst [vmem:[#allocation2 + $0x20] sm:$0xf] %v279
    %312 = vst [vmem:[#allocation2 + $0x24] sm:$0xf] %v280
    %313 = vst [vmem:[#allocation2 + $0x28] sm:$0xf] %v281
    %314 = vst [vmem:[#allocation2 + $0x2c] sm:$0xf] %v282
    %315 = vst [vmem:[#allocation2 + $0x30] sm:$0xf] %v283
    %316 = vst [vmem:[#allocation2 + $0x34] sm:$0xf] %v284
    %317 = vst [vmem:[#allocation2 + $0x38] sm:$0xf] %v285
    %318 = vst [vmem:[#allocation2 + $0x3c] sm:$0xf] %v286
    %319 = vst [vmem:[#allocation2 + $0x40] sm:$0xf] %v287
    %320 = vst [vmem:[#allocation2 + $0x44] sm:$0xf] %v288
    %321 = vst [vmem:[#allocation2 + $0x48] sm:$0xf] %v289
    %322 = vst [vmem:[#allocation2 + $0x4c] sm:$0xf] %v290
    %323 = vst [vmem:[#allocation2 + $0x50] sm:$0xf] %v291
    %324 = vst [vmem:[#allocation2 + $0x54] sm:$0xf] %v292
    %325 = vst [vmem:[#allocation2 + $0x58] sm:$0xf] %v293
    %326 = vst [vmem:[#allocation2 + $0x5c] sm:$0xf] %v294
    %327 = vst [vmem:[#allocation2 + $0x60] sm:$0xf] %v295
    %328 = vst [vmem:[#allocation2 + $0x64] sm:$0xf] %v296
    %329 = vst [vmem:[#allocation2 + $0x68] sm:$0xf] %v297
    %330 = vst [vmem:[#allocation2 + $0x6c] sm:$0xf] %v298
    %331 = vst [vmem:[#allocation2 + $0x70] sm:$0xf] %v299
    %332 = vst [vmem:[#allocation2 + $0x74] sm:$0xf] %v300
    %333 = vst [vmem:[#allocation2 + $0x78] sm:$0xf] %v301
    %334 = vst [vmem:[#allocation2 + $0x7c] sm:$0xf] %v302
    // Predicated region
    $region10: #{tpu_custom_call.1} parent=1 // pred_check
      _
    $region11: #{tpu_custom_call.1} parent=1 // pred_check_branch
      %336 = sbr.rel (0) target = $region13
    $region12: #{tpu_custom_call.1} parent=1 // pred_region
      %338 = vsyncadd [#allocation3], 0
      %s339 = sshll.u32 [#allocation2], 4
      %s340 = int_to_ptr.vmem [resolvable:$true] %s339
      %s341 = sshll.u32 %s2, 4
      %s342 = int_to_ptr.hbm [resolvable:$true] %s341
      %347 = dma.vmem_to_hbm [thread:$0]  %s340, 2048, %s342, [#allocation3], 64, 64, 4
    $region13: #{tpu_custom_call.1} parent=1 // pred_fallthru
      _
    // Predicated region
    $region14: #{tpu_custom_call.1} parent=1 // pred_check
      _
    $region15: #{tpu_custom_call.1} parent=1 // pred_check_branch
      %349 = sbr.rel (0) target = $region17
    $region16: #{tpu_custom_call.1} parent=1 // pred_region
      %351 = dma.done [#allocation3], 2048
    $region17: #{tpu_custom_call.1} parent=1 // pred_fallthru
      _
    %352 = vsyncpa [#allocation3], 1

</llo_original>
